<compile_context>
chip_gen: v7x
topology: tpu7x:2x2x1
jax: 0.10.0
libtpu: 0.0.40
codegen_flags: <defaults>
</compile_context>

<pallas_src>
import functools

import jax
import jax.numpy as jnp
from jax.experimental import pallas as pl
from jax.experimental.pallas import tpu as pltpu

LANES = 128
# In-kernel VMEM footprint budget used to derive the block size:
#   2 inputs x 2 pipeline buffers x block_bytes + ~4 f32 block temporaries + slack.
VMEM_BUDGET_BYTES = 40 << 20
VMEM_SLACK_BYTES = 8 << 20
# Below this many elements, a fused XLA reduction is already at roofline and the
# fixed pallas_call / grid overhead dominates -> plain JAX fallback.
MIN_KERNEL_ELEMS = 1 << 20


def _round_up(x: int, k: int) -> int:
    return ((x + k - 1) // k) * k


def _cdiv(a: int, b: int) -> int:
    return -(-a // b)


@functools.lru_cache(maxsize=1)
def _default_ncores() -> int:
    """Best-effort TensorCores-per-device count (megacore detection)."""
    try:
        d = jax.devices()[0]
        if d.platform != "tpu":
            return 1
        kind = str(getattr(d, "device_kind", "")).lower()
        # Megacore parts expose 2 TensorCores per device: v4, v5p, v7x.
        if any(tag in kind for tag in ("v4", "v5p", "v7")):
            return 2
    except Exception:
        pass
    return 1


def _mse_partial_kernel(s_ref, t_ref, o_ref, *, block_rows, blocks_per_core,
                        valid_rows, any_masked):
    """Accumulate per-lane partial sums of (s - t)^2 into a (1, 8, 128) slot.

    Grid = (core, step).  Each core zero-inits its own output slot on its first
    step and keeps an (8, 128) f32 lane-resident accumulator across its
    sequential steps.  Rows outside the real array (partial last block, or a
    clamped duplicate block when work doesn't split evenly across cores) are
    masked to zero — and that masking only runs on blocks that need it.
    """
    c = pl.program_id(0)
    i = pl.program_id(1)

    @pl.when(i == 0)
    def _():
        o_ref[...] = jnp.zeros_like(o_ref)

    d = s_ref[...].astype(jnp.float32) - t_ref[...].astype(jnp.float32)
    sq = d * d

    def _accumulate(vals):
        # Reduce only along the vreg-block axis (pure VPU vreg adds); keep an
        # (8, 128) lane-resident partial.  The single cross-lane reduce happens
        # once in the wrapper.
        o_ref[0] = o_ref[0] + vals.reshape(-1, 8, LANES).sum(axis=0)

    if not any_masked:
        # Statically known: every block of this grid is fully valid.
        _accumulate(sq)
    else:
        block_start = (c * blocks_per_core + i) * block_rows
        needs_mask = block_start + block_rows > valid_rows

        @pl.when(jnp.logical_not(needs_mask))
        def _():
            _accumulate(sq)

        @pl.when(needs_mask)
        def _():
            # Partial last block or clamped duplicate block: zero rows past the
            # valid range.  Keep the select (not a multiply-by-mask) so NaN/Inf
            # garbage in Pallas-padded rows cannot propagate.
            limit = valid_rows - block_start          # scalar (<=0 for dup blocks)
            row = jax.lax.broadcasted_iota(jnp.int32, (block_rows, LANES), 0)
            _accumulate(jnp.where(row < limit, sq, 0.0))


def _mse_ref(f_s: jax.Array, f_t: jax.Array) -> jax.Array:
    d = f_s.astype(jnp.float32) - f_t.astype(jnp.float32)
    return jnp.mean(d * d).astype(jnp.float32)


def hint_loss(f_s: jax.Array, f_t: jax.Array, *,
              max_block_rows: int | None = None,
              ncores: int | None = None,
              min_kernel_elems: int = MIN_KERNEL_ELEMS) -> jax.Array:
    """FitNets hint loss: MSE(f_s, f_t) with mean reduction (float32 scalar)."""
    assert f_s.shape == f_t.shape, "student/teacher feature shapes must match"
    n_elems = f_s.size

    # TODO(synk): element counts that are not a multiple of 128 fall back to a
    # single fused XLA reduction (already at HBM roofline); handling the ragged
    # tail in-kernel would need a 1-D block layout or manual DMA, whereas a
    # wrapper-side slice/pad would triple HBM traffic.
    if n_elems == 0 or n_elems < min_kernel_elems or n_elems % LANES != 0:
        return _mse_ref(f_s, f_t)

    m = n_elems // LANES
    s2d = f_s.reshape(m, LANES)   # contiguous reshape: no copy
    t2d = f_t.reshape(m, LANES)

    itemsize = int(jnp.dtype(f_s.dtype).itemsize)
    # Dtype-native sublane multiple: 8 (f32), 16 (bf16), 32 (int8/fp8).
    sub = max(8, 32 // max(itemsize, 1))

    # Largest block whose estimated VMEM footprint fits the budget.
    per_row_bytes = 4 * LANES * itemsize + 4 * LANES * 4   # stream bufs + f32 temps
    cap = (VMEM_BUDGET_BYTES - VMEM_SLACK_BYTES) // per_row_bytes
    cap = max(sub, (cap // sub) * sub)
    if max_block_rows is not None:
        cap = min(cap, max(sub, (int(max_block_rows) // sub) * sub))
    block_rows = min(cap, _round_up(m, sub))

    n_blocks = _cdiv(m, block_rows)
    nc = int(ncores) if ncores else _default_ncores()
    nc = max(1, min(2, nc))
    blocks_per_core = _cdiv(n_blocks, nc)
    grid = (nc, blocks_per_core)

    # Masking is needed only if there's a partial last block or a clamped
    # duplicate block (uneven split across cores).
    any_masked = (m % block_rows != 0) or (blocks_per_core * nc != n_blocks)

    def in_map(c, i):
        # Clamp so DMAs always stay in bounds; the kernel masks contributions
        # of clamped / out-of-range logical blocks.
        return (jnp.minimum(c * blocks_per_core + i, n_blocks - 1), 0)

    kernel = functools.partial(
        _mse_partial_kernel,
        block_rows=block_rows,
        blocks_per_core=blocks_per_core,
        valid_rows=m,
        any_masked=any_masked,
    )

    est_vmem = per_row_bytes * block_rows + VMEM_SLACK_BYTES
    vmem_limit = int(min(max(est_vmem, 16 << 20), 48 << 20))

    cost = pl.CostEstimate(
        flops=3 * n_elems,                 # sub, mul, add per element
        transcendentals=0,
        bytes_accessed=2 * n_elems * itemsize + nc * 8 * LANES * 4,
    )

    partials = pl.pallas_call(
        kernel,
        out_shape=jax.ShapeDtypeStruct((nc, 8, LANES), jnp.float32),
        grid_spec=pltpu.PrefetchScalarGridSpec(
            num_scalar_prefetch=0,
            grid=grid,
            in_specs=[
                pl.BlockSpec((block_rows, LANES), in_map),
                pl.BlockSpec((block_rows, LANES), in_map),
            ],
            out_specs=pl.BlockSpec((1, 8, LANES), lambda c, i: (c, 0, 0)),
        ),
        compiler_params=pltpu.CompilerParams(
            dimension_semantics=("parallel", "arbitrary"),
            vmem_limit_bytes=vmem_limit,
        ),
        cost_estimate=cost,
    )(s2d, t2d)

    # Mean over the ORIGINAL element count, matching nn.MSELoss(reduction='mean').
    return (jnp.sum(partials) / jnp.float32(n_elems)).astype(jnp.float32)


if __name__ == "__main__":
    root = jax.random.PRNGKey(0)

    def check(idx, shape, dtype=jnp.float32, **kwargs):
        k1, k2 = jax.random.split(jax.random.fold_in(root, idx))
        f_s = jax.random.normal(k1, shape, dtype=jnp.float32).astype(dtype)
        f_t = jax.random.normal(k2, shape, dtype=jnp.float32).astype(dtype)
        loss = hint_loss(f_s, f_t, **kwargs)
        jax.block_until_ready(loss)
        ref = _mse_ref(f_s, f_t)
        assert jnp.allclose(loss, ref, rtol=1e-5, atol=1e-6), (shape, dtype, loss, ref)

    # Primary NCHW feature-map case, forced through the Pallas kernel path.
    check(0, (2, 4, 16, 16), min_kernel_elems=0)
    # Partial last block + clamped duplicate-block masking on a forced 2-core grid.
    check(1, (2, 3, 16, 16), min_kernel_elems=0, max_block_rows=8, ncores=2)
    # Multi-step lane-resident accumulation on a single core.
    check(2, (4, 16, 32, 32), min_kernel_elems=0, max_block_rows=64, ncores=1)
    # bf16 inputs: dtype-aware (16, 128)-multiple block, f32 accumulation.
    check(3, (2, 8, 32, 32), dtype=jnp.bfloat16, min_kernel_elems=0)
    # Default path for tiny inputs: plain-JAX fallback.
    check(4, (2, 4, 16, 16))
    # Element count not a multiple of 128: ragged fallback path.
    check(5, (2, 5, 7, 31), min_kernel_elems=0)

    print("KERNEL_OK")
</pallas_src>

<mosaic_0001>
module attributes {stable_mosaic.version = 11 : i64} {
  func.func @_mse_partial_kernel(%arg0: i32, %arg1: i32, %arg2: memref<16x128xf32, #tpu.memory_space<vmem>>, %arg3: memref<16x128xf32, #tpu.memory_space<vmem>>, %arg4: memref<1x8x128xf32, #tpu.memory_space<vmem>>) attributes {dimension_semantics = [#tpu.dimension_semantics<parallel>, #tpu.dimension_semantics<arbitrary>], iteration_bounds = array<i64: 1, 1>, scalar_prefetch = 0 : i64, scratch_operands = 0 : i64, tpu.core_type = #tpu.core_type<tc>, window_params = [{transform_indices = @transform_0, window_bounds = array<i64: 16, 128>}, {transform_indices = @transform_1, window_bounds = array<i64: 16, 128>}, {transform_indices = @transform_2, window_bounds = array<i64: 1, 8, 128>}]} {
    %c0_i32 = arith.constant 0 : i32
    %0 = arith.cmpi eq, %arg1, %c0_i32 : i32
    %1 = arith.extui %0 : i1 to i32
    %c0_i32_0 = arith.constant 0 : i32
    %2 = arith.cmpi ne, %1, %c0_i32_0 : i32
    scf.if %2 {
      %cst_10 = arith.constant 0.000000e+00 : f32
      %15 = vector.broadcast %cst_10 : f32 to vector<1x8x128xf32>
      %c0_11 = arith.constant 0 : index
      %c0_12 = arith.constant 0 : index
      %c0_13 = arith.constant 0 : index
      %16 = vector.load %arg4[%c0_11, %c0_12, %c0_13] : memref<1x8x128xf32, #tpu.memory_space<vmem>>, vector<1x8x128xf32>
      tpu.vector_store %arg4[%c0_11, %c0_12, %c0_13], %15 {strides = array<i32>} : memref<1x8x128xf32, #tpu.memory_space<vmem>>, vector<1x8x128xf32>,
    } else {
    }
    %c0 = arith.constant 0 : index
    %c0_1 = arith.constant 0 : index
    %3 = vector.load %arg2[%c0, %c0_1] : memref<16x128xf32, #tpu.memory_space<vmem>>, vector<16x128xf32>
    %c0_2 = arith.constant 0 : index
    %c0_3 = arith.constant 0 : index
    %4 = vector.load %arg3[%c0_2, %c0_3] : memref<16x128xf32, #tpu.memory_space<vmem>>, vector<16x128xf32>
    %5 = arith.subf %3, %4 : vector<16x128xf32>
    %6 = arith.mulf %5, %5 : vector<16x128xf32>
    %c0_4 = arith.constant 0 : index
    %c0_5 = arith.constant 0 : index
    %c0_6 = arith.constant 0 : index
    %7 = vector.load %arg4[%c0_4, %c0_5, %c0_6] : memref<1x8x128xf32, #tpu.memory_space<vmem>>, vector<1x8x128xf32>
    %8 = vector.shape_cast %7 : vector<1x8x128xf32> to vector<8x128xf32>
    %9 = vector.shape_cast %6 : vector<16x128xf32> to vector<2x8x128xf32>
    %cst = arith.constant dense<0.000000e+00> : vector<8x128xf32>
    %10 = vector.multi_reduction <add>, %9, %cst [0] : vector<2x8x128xf32> to vector<8x128xf32>
    %11 = arith.addf %8, %10 : vector<8x128xf32>
    %c0_7 = arith.constant 0 : index
    %c0_8 = arith.constant 0 : index
    %c0_9 = arith.constant 0 : index
    %12 = vector.load %arg4[%c0_7, %c0_8, %c0_9] : memref<1x8x128xf32, #tpu.memory_space<vmem>>, vector<1x8x128xf32>
    %13 = vector.shape_cast %12 : vector<1x8x128xf32> to vector<8x128xf32>
    %14 = vector.shape_cast %11 : vector<8x128xf32> to vector<1x8x128xf32>
    tpu.vector_store %arg4[%c0_7, %c0_8, %c0_9], %14 {strides = array<i32>} : memref<1x8x128xf32, #tpu.memory_space<vmem>>, vector<1x8x128xf32>,
    return
  }
  func.func @transform_0(%arg0: i32, %arg1: i32) -> (i32, i32) {
    %c1_i32 = arith.constant 1 : i32
    %0 = arith.muli %arg0, %c1_i32 : i32
    %1 = arith.addi %0, %arg1 : i32
    %c0_i32 = arith.constant 0 : i32
    %2 = arith.minsi %1, %c0_i32 : i32
    %c0_i32_0 = arith.constant 0 : i32
    %c0_i32_1 = arith.constant 0 : i32
    return %2, %c0_i32_0 : i32, i32
  }
  func.func @transform_1(%arg0: i32, %arg1: i32) -> (i32, i32) {
    %c1_i32 = arith.constant 1 : i32
    %0 = arith.muli %arg0, %c1_i32 : i32
    %1 = arith.addi %0, %arg1 : i32
    %c0_i32 = arith.constant 0 : i32
    %2 = arith.minsi %1, %c0_i32 : i32
    %c0_i32_0 = arith.constant 0 : i32
    %c0_i32_1 = arith.constant 0 : i32
    return %2, %c0_i32_0 : i32, i32
  }
  func.func @transform_2(%arg0: i32, %arg1: i32) -> (i32, i32, i32) {
    %c0_i32 = arith.constant 0 : i32
    %c0_i32_0 = arith.constant 0 : i32
    %c0_i32_1 = arith.constant 0 : i32
    return %arg0, %c0_i32, %c0_i32_0 : i32, i32, i32
  }
}

</mosaic_0001>

<llo_original>
// kernel: tpu_custom_call.1
$region0: #{tpu_custom_call.1}
  #allocation0 [shape = 'u32[]', space=smem, size = 0x4, offset = 0x4, fixed_abs, tag = 'smem constant byte address 0x4 - core index']
  #allocation1 [shape = 'u32[144,128]{1,0:T(1,128)}', space=vmem, size = 0x12000, scoped, tag = 'internal scratch']
  %s0 = inlined_call_operand.hbm [shape: f32[16,128], index: 0, kind: input, shape index: {}]
  %s1 = inlined_call_operand.hbm [shape: f32[16,128], index: 1, kind: input, shape index: {}]
  %s2 = inlined_call_operand.hbm [shape: f32[1,8,128], index: 2, kind: output, shape index: {}]
  %s3 = sld [smem:[#allocation0]]
  $region30: #{tpu_custom_call.1} parent=0
    _
  %s5 = ssub.s32 1, %s3
  %s6 = scalar_select 0, %s5, %s3
  $region1: #{tpu_custom_call.1} parent=0
    #allocation2 [shape = 'u8[8192]{0}', space=vmem, size = 0x2000, scoped, tag = 'input window, operand 0, single buffered']
    #allocation3 [shape = 's32[1]{0}', space=sflag, size = 0x4, scoped, tag = 'scoped memory for tpu_custom_call.1']
    #allocation4 [shape = 's32[1]{0}', space=sflag, size = 0x4, scoped, tag = 'scoped memory for tpu_custom_call.1']
    #allocation5 [shape = 'u8[8192]{0}', space=vmem, size = 0x2000, scoped, tag = 'input window, operand 1, single buffered']
    #allocation6 [shape = 's32[1]{0}', space=sflag, size = 0x4, scoped, tag = 'scoped memory for tpu_custom_call.1']
    #allocation7 [shape = 'u8[4096]{0}', space=vmem, size = 0x1000, scoped, tag = 'output window, operand 0, single buffered']
    %7 = vsyncpa [#allocation3], 0
    %8 = vsyncpa [#allocation6], 0
    %9 = vsyncpa [#allocation4], 0
    // Predicated region
    $region2: #{tpu_custom_call.1} parent=1 // pred_check
      _
    $region3: #{tpu_custom_call.1} parent=1 // pred_check_branch
      %11 = sbr.rel (0) target = $region5
    $region4: #{tpu_custom_call.1} parent=1 // pred_region
      %s12 = sadd.s32 0, 0
      %p13 = scmp.lt.s32.totalorder %s12, 0
      %s14 = scalar_select %p13, %s12, 0
      %s15 = smul.u32 2, %s14
      %s17 = ssub.s32 256, 256
      %18 = vsyncadd [#allocation3], %s17
      %s19 = smul.addr %s15, 128
      %s20 = scalar_lea.hbm %s0, %s19
      %s21 = sshll.u32 [#allocation2], 4
      %s22 = int_to_ptr.vmem [resolvable:$true] %s21
      %27 = dma.hbm_to_vmem [thread:$0]  %s20, 256, %s22, [#allocation3], 128, 128, 8
    $region5: #{tpu_custom_call.1} parent=1 // pred_fallthru
      _
    // Predicated region
    $region6: #{tpu_custom_call.1} parent=1 // pred_check
      _
    $region7: #{tpu_custom_call.1} parent=1 // pred_check_branch
      %29 = sbr.rel (0) target = $region9
    $region8: #{tpu_custom_call.1} parent=1 // pred_region
      %s30 = sadd.s32 0, 0
      %p31 = scmp.lt.s32.totalorder %s30, 0
      %s32 = scalar_select %p31, %s30, 0
      %s33 = smul.u32 2, %s32
      %s35 = ssub.s32 256, 256
      %36 = vsyncadd [#allocation6], %s35
      %s37 = smul.addr %s33, 128
      %s38 = scalar_lea.hbm %s1, %s37
      %s39 = sshll.u32 [#allocation5], 4
      %s40 = int_to_ptr.vmem [resolvable:$true] %s39
      %45 = dma.hbm_to_vmem [thread:$0]  %s38, 256, %s40, [#allocation6], 128, 128, 8
    $region9: #{tpu_custom_call.1} parent=1 // pred_fallthru
      _
    // Predicated region
    $region10: #{tpu_custom_call.1} parent=1 // pred_check
      _
    $region11: #{tpu_custom_call.1} parent=1 // pred_check_branch
      %47 = sbr.rel (0) target = $region13
    $region12: #{tpu_custom_call.1} parent=1 // pred_region
      %48 = dma.done [#allocation3], 256
    $region13: #{tpu_custom_call.1} parent=1 // pred_fallthru
      _
    // Predicated region
    $region14: #{tpu_custom_call.1} parent=1 // pred_check
      _
    $region15: #{tpu_custom_call.1} parent=1 // pred_check_branch
      %50 = sbr.rel (0) target = $region17
    $region16: #{tpu_custom_call.1} parent=1 // pred_region
      %51 = dma.done [#allocation6], 256
    $region17: #{tpu_custom_call.1} parent=1 // pred_fallthru
      _
    %s52 = sadd.s32 0, 0
    %p53 = scmp.lt.s32.totalorder %s52, 0
    %s54 = scalar_select %p53, %s52, 0
    %s55 = smul.u32 2, %s54
    %s56 = sadd.s32 0, 0
    %p57 = scmp.lt.s32.totalorder %s56, 0
    %s58 = scalar_select %p57, %s56, 0
    %s59 = smul.u32 2, %s58
    %p60 = scmp.eq.s32.totalorder 0, 0
    // Predicated region
    $region18: #{tpu_custom_call.1} parent=1 // pred_check
      %p61 = pneg %p60
    $region19: #{tpu_custom_call.1} parent=1 // pred_check_branch
      %63 = sbr.rel (%p61) target = $region21
    $region20: #{tpu_custom_call.1} parent=1 // pred_region
      %64 = vst [vmem:[#allocation7] sm:$0xff] 0.0
    $region21: #{tpu_custom_call.1} parent=1 // pred_fallthru
      _
    %v65 = vld [vmem:[#allocation2] sm:$0xff]
    %v66 = vld [vmem:[#allocation2 + $0x8] sm:$0xff]
    %v67 = vld [vmem:[#allocation5] sm:$0xff]
    %v68 = vld [vmem:[#allocation5 + $0x8] sm:$0xff]
    %v69 = vsub.f32 %v65, %v67
    %v70 = vsub.f32 %v66, %v68
    %v71 = vmul.f32 %v69, %v69
    %v72 = vmul.f32 %v70, %v70
    %v73 = vld [vmem:[#allocation7] sm:$0xff]
    %v74 = vadd.f32 %v71, %v72
    %v75 = vadd.f32 %v73, %v74
    %76 = vst [vmem:[#allocation7] sm:$0xff] %v75
    // Predicated region
    $region22: #{tpu_custom_call.1} parent=1 // pred_check
      _
    $region23: #{tpu_custom_call.1} parent=1 // pred_check_branch
      %78 = sbr.rel (0) target = $region25
    $region24: #{tpu_custom_call.1} parent=1 // pred_region
      %s80 = ssub.s32 128, 128
      %81 = vsyncadd [#allocation4], %s80
      %s83 = sshll.u32 [#allocation7], 4
      %s84 = int_to_ptr.vmem [resolvable:$true] %s83
      %86 = dma.vmem_to_hbm [thread:$0]  %s84, 128, %s2, [#allocation4]
    $region25: #{tpu_custom_call.1} parent=1 // pred_fallthru
      _
    // Predicated region
    $region26: #{tpu_custom_call.1} parent=1 // pred_check
      _
    $region27: #{tpu_custom_call.1} parent=1 // pred_check_branch
      %88 = sbr.rel (0) target = $region29
    $region28: #{tpu_custom_call.1} parent=1 // pred_region
      %89 = dma.done [#allocation4], 128
    $region29: #{tpu_custom_call.1} parent=1 // pred_fallthru
      _
    %90 = vsyncpa [#allocation3], 1
    %91 = vsyncpa [#allocation6], 1
    %92 = vsyncpa [#allocation4], 1

</llo_original>
